<compile_context>
chip_gen: v7x
topology: tpu7x:2x2x1
jax: 0.10.0
libtpu: 0.0.40
codegen_flags: <defaults>
</compile_context>

<pallas_src>
import functools
import math

import jax
import jax.numpy as jnp
from jax.experimental import pallas as pl
from jax.experimental.pallas import tpu as pltpu

_COMPUTE_DTYPE = jnp.bfloat16      # MXU operand dtype; accumulation is always f32
_LN_EPS = 1e-5
_MASK_VALUE = -1e30                # additive mask for padded key columns
_SINGLE_BUFFER_BYTES = 2 << 20     # only single-buffer really large invariant operands


# --------------------------------------------------------------------------- config helpers

@functools.lru_cache(maxsize=1)
def _tpu_config():
    """Generation-aware VMEM budget and tile sizes.

    Returns (vmem_limit_bytes, tm_rows, tq_rows, tk_rows, t_hidden).
    """
    try:
        vmem_cap = pltpu.get_tpu_info().vmem_capacity_bytes
    except Exception:
        vmem_cap = 64 << 20
    if vmem_cap <= (64 << 20):            # v7x-class TensorCore: 64 MiB physical VMEM
        return 48 << 20, 256, 256, 512, 512
    # v5e / v6e: 128 MiB physical VMEM -> larger row tiles (closer to HBM roofline)
    return 100 << 20, 512, 512, 512, 1024


def _compiler_params(dim_sem):
    return pltpu.CompilerParams(dimension_semantics=dim_sem,
                                vmem_limit_bytes=_tpu_config()[0])


def _invariant_spec(arr, block_shape, index_map):
    """BlockSpec for grid-invariant operands (weights).

    Multi-MiB invariant operands are requested single-buffered so the default double
    buffer does not waste VMEM; small operands (as in the demo) keep the default.
    """
    nbytes = arr.size * arr.dtype.itemsize
    if nbytes >= _SINGLE_BUFFER_BYTES:
        return pl.BlockSpec(block_shape, index_map, pipeline_mode=pl.Buffered(1))
    return pl.BlockSpec(block_shape, index_map)


def _divisor_tile(total, target, mult=128):
    """Largest tile <= target that divides `total` and is a multiple of `mult`."""
    if total <= target:
        return total
    t = (target // mult) * mult
    while t >= mult:
        if total % t == 0:
            return t
        t -= mult
    return total


# --------------------------------------------------------------------------- K/V projection

def _kv_proj_shared_kernel(x_ref, w_ref, b_ref, o_ref):
    """K and V projections of the SAME input as one lane-dense [tm, 2D] matmul."""
    y = jnp.dot(x_ref[...].astype(_COMPUTE_DTYPE), w_ref[...].astype(_COMPUTE_DTYPE),
                preferred_element_type=jnp.float32)
    o_ref[...] = (y + b_ref[...].astype(jnp.float32)).astype(o_ref.dtype)


def _kv_proj_split_kernel(xk_ref, xv_ref, w_ref, b_ref, o_ref, *, d):
    """K and V projections of two different inputs, written as one [tm, 2D] slab."""
    w = w_ref[...].astype(_COMPUTE_DTYPE)
    k = jnp.dot(xk_ref[...].astype(_COMPUTE_DTYPE), w[:, :d],
                preferred_element_type=jnp.float32)
    v = jnp.dot(xv_ref[...].astype(_COMPUTE_DTYPE), w[:, d:],
                preferred_element_type=jnp.float32)
    y = jnp.concatenate([k, v], axis=-1) + b_ref[...].astype(jnp.float32)
    o_ref[...] = y.astype(o_ref.dtype)


def _project_kv(key_in, value_in, wkv, bkv):
    """[key_in @ Wk + bk | value_in @ Wv + bv] as a single lane-dense (B, S, 2D) array."""
    B, S, D = key_in.shape
    M = B * S
    _, tm, _, _, _ = _tpu_config()
    tm = min(tm, M)
    b2 = bkv.reshape(1, 2 * D)

    x_spec = pl.BlockSpec((tm, D), lambda m: (m, 0))
    w_spec = _invariant_spec(wkv, (D, 2 * D), lambda m: (0, 0))
    b_spec = pl.BlockSpec((1, 2 * D), lambda m: (0, 0))

    if key_in is value_in:
        kernel = _kv_proj_shared_kernel
        operands = (key_in.reshape(M, D), wkv, b2)
        in_specs = [x_spec, w_spec, b_spec]
    else:
        kernel = functools.partial(_kv_proj_split_kernel, d=D)
        operands = (key_in.reshape(M, D), value_in.reshape(M, D), wkv, b2)
        in_specs = [x_spec, x_spec, w_spec, b_spec]

    out = pl.pallas_call(
        kernel,
        grid=(pl.cdiv(M, tm),),
        in_specs=in_specs,
        out_specs=pl.BlockSpec((tm, 2 * D), lambda m: (m, 0)),
        out_shape=jax.ShapeDtypeStruct((M, 2 * D), key_in.dtype),
        compiler_params=_compiler_params(("parallel",)),
    )(*operands)
    return out.reshape(B, S, 2 * D)


# --------------------------------------------------------------------------- fused attention

def _mha_flash_kernel(xq_ref, wq_ref, bq_ref, kv_ref, bias_ref, wo_ref, bo_ref,
                      r_ref, g_ref, beta_ref, o_ref,
                      q_sc, m_sc, l_sc, ctx_sc,
                      *, num_heads, scale, eps, kv_len, block_k):
    """One (batch, query-tile, kv-tile) grid step of:
    LayerNorm(resid + W_o @ softmax(QK^T * scale + bias) V + b_o), flash-style over KV."""
    d = ctx_sc.shape[-1]
    dh = d // num_heads
    kv_step = pl.program_id(2)
    num_kv = pl.num_programs(2)

    @pl.when(kv_step == 0)
    def _init():
        # Fused Q projection (one [tq,D]x[D,D] MXU pass), pre-scaled by 1/sqrt(dh).
        q = jnp.dot(xq_ref[...].astype(_COMPUTE_DTYPE), wq_ref[...].astype(_COMPUTE_DTYPE),
                    preferred_element_type=jnp.float32)
        q = (q + bq_ref[...].astype(jnp.float32)) * scale
        q_sc[...] = q.astype(q_sc.dtype)
        m_sc[...] = jnp.full_like(m_sc, -jnp.inf)
        l_sc[...] = jnp.zeros_like(l_sc)
        ctx_sc[...] = jnp.zeros_like(ctx_sc)

    kvb = kv_ref[...].astype(_COMPUTE_DTYPE)      # [tk, 2D]  (K | V slab)
    k = kvb[:, :d]
    v = kvb[:, d:]
    bias = bias_ref[...].astype(jnp.float32)      # [tq, tk] additive mask
    q = q_sc[...]                                 # [tq, D], pre-scaled

    needs_col_mask = (kv_len % block_k) != 0      # static: mask padded key columns
    if needs_col_mask:
        col = kv_step * block_k + jax.lax.broadcasted_iota(jnp.int32, bias.shape, 1)
        col_ok = col < kv_len

    for h in range(num_heads):                    # static unroll over heads
        sl = slice(h * dh, (h + 1) * dh)
        hc = slice(h, h + 1)
        s = jax.lax.dot_general(q[:, sl], k[:, sl], (((1,), (1,)), ((), ())),
                                preferred_element_type=jnp.float32)
        s = s + bias
        if needs_col_mask:
            s = jnp.where(col_ok, s, _MASK_VALUE)
        m_prev = m_sc[:, hc]
        m_new = jnp.maximum(m_prev, jnp.max(s, axis=-1, keepdims=True))
        alpha = jnp.exp(m_prev - m_new)
        p = jnp.exp(s - m_new)
        l_sc[:, hc] = alpha * l_sc[:, hc] + jnp.sum(p, axis=-1, keepdims=True)
        ctx_sc[:, sl] = alpha * ctx_sc[:, sl] + jnp.dot(
            p.astype(_COMPUTE_DTYPE), v[:, sl], preferred_element_type=jnp.float32)
        m_sc[:, hc] = m_new

    @pl.when(kv_step == num_kv - 1)
    def _finalize():
        # per-head softmax normalization, then ONE [tq,D]x[D,D] output projection
        for h in range(num_heads):
            sl = slice(h * dh, (h + 1) * dh)
            inv = pl.reciprocal(jnp.maximum(l_sc[:, h:h + 1], 1e-30), approx=True)
            ctx_sc[:, sl] = ctx_sc[:, sl] * inv
        out = jnp.dot(ctx_sc[...].astype(_COMPUTE_DTYPE), wo_ref[...].astype(_COMPUTE_DTYPE),
                      preferred_element_type=jnp.float32)
        y = out + bo_ref[...].astype(jnp.float32) + r_ref[...].astype(jnp.float32)
        mu = jnp.mean(y, axis=-1, keepdims=True)
        var = jnp.mean((y - mu) ** 2, axis=-1, keepdims=True)
        yn = (y - mu) * jax.lax.rsqrt(var + eps)
        o_ref[...] = (yn * g_ref[...].astype(jnp.float32)
                      + beta_ref[...].astype(jnp.float32)).astype(o_ref.dtype)


def multi_head_attention(key_in, query_in, value_in, bias, resid, gamma, beta, p,
                         *, eps=_LN_EPS):
    """LayerNorm(resid + W_o @ MHA(key_in, query_in, value_in) + b_o), one fused pallas_call
    (plus one preceding lane-dense K/V-projection call)."""
    B, Sq, D = query_in.shape
    Sk = key_in.shape[1]
    H = p["num_heads"]
    scale = 1.0 / math.sqrt(D // H)

    _, _, tq, tk, _ = _tpu_config()
    tq = min(tq, Sq)
    tk = min(tk, Sk)
    nq = pl.cdiv(Sq, tq)
    nkv = pl.cdiv(Sk, tk)

    kv = _project_kv(key_in, value_in, p["wkv"], p["bkv"])        # (B, Sk, 2D)

    if bias.shape[0] == 1:
        bias_map = lambda b, i, k: (0, i, k)
    else:
        bias_map = lambda b, i, k: (b, i, k)

    kernel = functools.partial(_mha_flash_kernel, num_heads=H, scale=scale, eps=eps,
                               kv_len=Sk, block_k=tk)

    return pl.pallas_call(
        kernel,
        grid=(B, nq, nkv),
        in_specs=[
            pl.BlockSpec((None, tq, D), lambda b, i, k: (b, i, 0)),      # raw query tile
            _invariant_spec(p["wq"], (D, D), lambda b, i, k: (0, 0)),    # W_q
            pl.BlockSpec((1, D), lambda b, i, k: (0, 0)),                # b_q
            pl.BlockSpec((None, tk, 2 * D), lambda b, i, k: (b, k, 0)),  # [K|V] tile
            pl.BlockSpec((None, tq, tk), bias_map),                      # additive mask
            _invariant_spec(p["wo"], (D, D), lambda b, i, k: (0, 0)),    # W_o
            pl.BlockSpec((1, D), lambda b, i, k: (0, 0)),                # b_o
            pl.BlockSpec((None, tq, D), lambda b, i, k: (b, i, 0)),      # residual
            pl.BlockSpec((1, D), lambda b, i, k: (0, 0)),                # LN gamma
            pl.BlockSpec((1, D), lambda b, i, k: (0, 0)),                # LN beta
        ],
        out_specs=pl.BlockSpec((None, tq, D), lambda b, i, k: (b, i, 0)),
        out_shape=jax.ShapeDtypeStruct((B, Sq, D), query_in.dtype),
        scratch_shapes=[
            pltpu.VMEM((tq, D), _COMPUTE_DTYPE),     # pre-scaled projected Q
            pltpu.VMEM((tq, H), jnp.float32),        # running max   (one column per head)
            pltpu.VMEM((tq, H), jnp.float32),        # running denom (one column per head)
            pltpu.VMEM((tq, D), jnp.float32),        # unnormalized context, head slices
        ],
        compiler_params=_compiler_params(("parallel", "parallel", "arbitrary")),
    )(query_in, p["wq"], p["bq"].reshape(1, D), kv, bias,
      p["wo"], p["bo"].reshape(1, D), resid,
      gamma.reshape(1, D), beta.reshape(1, D))


# --------------------------------------------------------------------------- fused FFN + LN

def _ffn_kernel(x_ref, w1_ref, b1_ref, w2_ref, b2_ref, g_ref, beta_ref, o_ref,
                acc_ref, *, eps):
    step = pl.program_id(1)

    @pl.when(step == 0)
    def _():
        acc_ref[...] = jnp.zeros_like(acc_ref)

    x = x_ref[...].astype(_COMPUTE_DTYPE)
    h = jnp.dot(x, w1_ref[...].astype(_COMPUTE_DTYPE), preferred_element_type=jnp.float32)
    h = jnp.maximum(h + b1_ref[...].astype(jnp.float32), 0.0)
    acc_ref[...] += jnp.dot(h.astype(_COMPUTE_DTYPE), w2_ref[...].astype(_COMPUTE_DTYPE),
                            preferred_element_type=jnp.float32)

    @pl.when(step == pl.num_programs(1) - 1)
    def _():
        y = acc_ref[...] + b2_ref[...].astype(jnp.float32) + x_ref[...].astype(jnp.float32)
        mu = jnp.mean(y, axis=-1, keepdims=True)
        var = jnp.mean((y - mu) ** 2, axis=-1, keepdims=True)
        yn = (y - mu) * jax.lax.rsqrt(var + eps)
        o_ref[...] = (yn * g_ref[...].astype(jnp.float32)
                      + beta_ref[...].astype(jnp.float32)).astype(o_ref.dtype)


def ffn_add_layernorm(x, w1, b1, w2, b2, gamma, beta, *, eps=_LN_EPS):
    """LayerNorm(x + Linear2(ReLU(Linear1(x)))), tiled over rows AND the hidden dim."""
    B, S, D = x.shape
    Dh = w1.shape[1]
    M = B * S
    _, tm, _, _, th = _tpu_config()
    tm = min(tm, M)
    th = _divisor_tile(Dh, th)

    out = pl.pallas_call(
        functools.partial(_ffn_kernel, eps=eps),
        grid=(pl.cdiv(M, tm), Dh // th),
        in_specs=[
            pl.BlockSpec((tm, D), lambda m, h: (m, 0)),        # x tile (resident over h)
            pl.BlockSpec((D, th), lambda m, h: (0, h)),        # W1 hidden-column tile
            pl.BlockSpec((1, th), lambda m, h: (0, h)),        # b1 tile
            pl.BlockSpec((th, D), lambda m, h: (h, 0)),        # W2 hidden-row tile
            pl.BlockSpec((1, D), lambda m, h: (0, 0)),         # b2
            pl.BlockSpec((1, D), lambda m, h: (0, 0)),         # LN gamma
            pl.BlockSpec((1, D), lambda m, h: (0, 0)),         # LN beta
        ],
        out_specs=pl.BlockSpec((tm, D), lambda m, h: (m, 0)),
        out_shape=jax.ShapeDtypeStruct((M, D), x.dtype),
        scratch_shapes=[pltpu.VMEM((tm, D), jnp.float32)],
        compiler_params=_compiler_params(("parallel", "arbitrary")),
    )(x.reshape(M, D), w1, b1.reshape(1, Dh), w2, b2.reshape(1, D),
      gamma.reshape(1, D), beta.reshape(1, D))
    return out.reshape(B, S, D)


# --------------------------------------------------------------------------- DecoderBlock

def init_mha_params(key, D, H, scale=0.02):
    ks = jax.random.split(key, 4)

    def w(k):
        return (scale * jax.random.normal(k, (D, D), jnp.float32)).astype(_COMPUTE_DTYPE)

    wk, wv = w(ks[1]), w(ks[2])
    return {
        "num_heads": H,
        "wq": w(ks[0]), "bq": jnp.zeros((D,), jnp.float32),
        # K|V projection weights stored pre-concatenated -> one lane-dense (tm, 2D) slab
        "wkv": jnp.concatenate([wk, wv], axis=1), "bkv": jnp.zeros((2 * D,), jnp.float32),
        "wo": w(ks[3]), "bo": jnp.zeros((D,), jnp.float32),
    }


def init_decoder_block_params(key, D, H, expansion):
    k1, k2, k3, k4 = jax.random.split(key, 4)
    Dh = D * expansion
    return {
        "self_attn": init_mha_params(k1, D, H),
        "ln1_g": jnp.ones((D,), jnp.float32),
        "ln1_b": jnp.zeros((D,), jnp.float32),
        "enc_attn": init_mha_params(k2, D, H),
        "enc_ln1_g": jnp.ones((D,), jnp.float32),
        "enc_ln1_b": jnp.zeros((D,), jnp.float32),
        "ffn_w1": (0.02 * jax.random.normal(k3, (D, Dh), jnp.float32)).astype(_COMPUTE_DTYPE),
        "ffn_b1": jnp.zeros((Dh,), jnp.float32),
        "ffn_w2": (0.02 * jax.random.normal(k4, (Dh, D), jnp.float32)).astype(_COMPUTE_DTYPE),
        "ffn_b2": jnp.zeros((D,), jnp.float32),
        "enc_ln2_g": jnp.ones((D,), jnp.float32),
        "enc_ln2_b": jnp.zeros((D,), jnp.float32),
    }


def decoder_block(params, dec_k, dec_q, dec_v, enc_k, enc_q, enc_v,
                  self_bias, cross_bias):
    # dropout layers are identity in eval mode; encoder_query (enc_q) is accepted
    # but unused, exactly like the torch forward.
    del enc_q

    # masked self-attention + W_o + residual(dec_v) + LayerNorm (fused)
    x1 = multi_head_attention(dec_k, dec_q, dec_v, self_bias, resid=dec_v,
                              gamma=params["ln1_g"], beta=params["ln1_b"],
                              p=params["self_attn"])
    # cross attention (query = x1) + W_o + residual(x1) + LayerNorm (fused)
    y = multi_head_attention(enc_k, x1, enc_v, cross_bias, resid=x1,
                             gamma=params["enc_ln1_g"], beta=params["enc_ln1_b"],
                             p=params["enc_attn"])
    # FFN + residual + LayerNorm (fused, hidden dim tiled)
    out = ffn_add_layernorm(y, params["ffn_w1"], params["ffn_b1"],
                            params["ffn_w2"], params["ffn_b2"],
                            params["enc_ln2_g"], params["enc_ln2_b"])
    return out


# --------------------------------------------------------------------------- main

if __name__ == "__main__":
    B = 2          # batch
    S_dec = 8      # target (decoder) sequence length
    S_enc = 16     # source (encoder) sequence length
    D = 32         # embedding_dim
    H = 4          # no_heads (head_dim = 8)
    EXP = 4        # expansion_factor

    root = jax.random.PRNGKey(0)
    kp, kd1, kd2, kd3, ke1, ke2, ke3 = jax.random.split(root, 7)

    params = init_decoder_block_params(kp, D, H, EXP)

    dec_k = jax.random.normal(kd1, (B, S_dec, D), jnp.float32)
    dec_q = jax.random.normal(kd2, (B, S_dec, D), jnp.float32)
    dec_v = jax.random.normal(kd3, (B, S_dec, D), jnp.float32)
    enc_k = jax.random.normal(ke1, (B, S_enc, D), jnp.float32)
    enc_q = jax.random.normal(ke2, (B, S_enc, D), jnp.float32)
    enc_v = jax.random.normal(ke3, (B, S_enc, D), jnp.float32)

    # Additive masks shared across the batch -> kept as (1, Sq, Sk) so no B-sized
    # broadcast copy ever lands in HBM.
    neg = float(jnp.finfo(jnp.float32).min) * 0.5
    causal = jnp.tril(jnp.ones((S_dec, S_dec), jnp.float32))
    self_bias = jnp.where(causal > 0, 0.0, neg)[None, :, :].astype(jnp.float32)
    cross_bias = jnp.zeros((1, S_dec, S_enc), jnp.float32)

    out = decoder_block(params, dec_k, dec_q, dec_v, enc_k, enc_q, enc_v,
                        self_bias, cross_bias)
    out = jax.block_until_ready(out)

    assert out.shape == (B, S_dec, D), out.shape
    assert bool(jnp.all(jnp.isfinite(out)))
    print("KERNEL_OK")
</pallas_src>

<mosaic_0001>
module attributes {stable_mosaic.version = 11 : i64} {
  func.func @_kv_proj_split_kernel(%arg0: i32, %arg1: memref<16x32xf32, #tpu.memory_space<vmem>>, %arg2: memref<16x32xf32, #tpu.memory_space<vmem>>, %arg3: memref<32x64xbf16, #tpu.memory_space<vmem>>, %arg4: memref<1x64xf32, #tpu.memory_space<vmem>>, %arg5: memref<16x64xf32, #tpu.memory_space<vmem>>) attributes {dimension_semantics = [#tpu.dimension_semantics<parallel>], iteration_bounds = array<i64: 1>, scalar_prefetch = 0 : i64, scratch_operands = 0 : i64, tpu.core_type = #tpu.core_type<tc>, window_params = [{transform_indices = @transform_0, window_bounds = array<i64: 16, 32>}, {transform_indices = @transform_1, window_bounds = array<i64: 16, 32>}, {pipeline_mode = #tpu.pipeline_mode<synchronous>, transform_indices = @transform_2, window_bounds = array<i64: 32, 64>}, {pipeline_mode = #tpu.pipeline_mode<synchronous>, transform_indices = @transform_3, window_bounds = array<i64: 1, 64>}, {transform_indices = @transform_4, window_bounds = array<i64: 16, 64>}]} {
    %c0 = arith.constant 0 : index
    %c0_0 = arith.constant 0 : index
    %0 = vector.load %arg3[%c0, %c0_0] : memref<32x64xbf16, #tpu.memory_space<vmem>>, vector<32x64xbf16>
    %c0_1 = arith.constant 0 : index
    %c0_2 = arith.constant 0 : index
    %1 = vector.load %arg1[%c0_1, %c0_2] : memref<16x32xf32, #tpu.memory_space<vmem>>, vector<16x32xf32>
    %2 = arith.truncf %1 : vector<16x32xf32> to vector<16x32xbf16>
    %3 = vector.extract_strided_slice %0 {offsets = [0, 0], sizes = [32, 32], strides = [1, 1]} : vector<32x64xbf16> to vector<32x32xbf16>
    %cst = arith.constant dense<0.000000e+00> : vector<16x32xf32>
    %4 = tpu.matmul %2, %3, %cst {dimension_numbers = #tpu.dot_dimension_numbers<[1], [0], [0], [1], [0, 0, 1, 1], [], []>} : vector<16x32xbf16>, vector<32x32xbf16>, vector<16x32xf32> -> vector<16x32xf32>
    %c0_3 = arith.constant 0 : index
    %c0_4 = arith.constant 0 : index
    %5 = vector.load %arg2[%c0_3, %c0_4] : memref<16x32xf32, #tpu.memory_space<vmem>>, vector<16x32xf32>
    %6 = arith.truncf %5 : vector<16x32xf32> to vector<16x32xbf16>
    %7 = vector.extract_strided_slice %0 {offsets = [0, 32], sizes = [32, 32], strides = [1, 1]} : vector<32x64xbf16> to vector<32x32xbf16>
    %cst_5 = arith.constant dense<0.000000e+00> : vector<16x32xf32>
    %8 = tpu.matmul %6, %7, %cst_5 {dimension_numbers = #tpu.dot_dimension_numbers<[1], [0], [0], [1], [0, 0, 1, 1], [], []>} : vector<16x32xbf16>, vector<32x32xbf16>, vector<16x32xf32> -> vector<16x32xf32>
    %9 = tpu.concatenate %4, %8 in 1 : vector<16x32xf32>, vector<16x32xf32> -> vector<16x64xf32>
    %c0_6 = arith.constant 0 : index
    %c0_7 = arith.constant 0 : index
    %10 = vector.load %arg4[%c0_6, %c0_7] : memref<1x64xf32, #tpu.memory_space<vmem>>, vector<1x64xf32>
    %11 = vector.broadcast %10 : vector<1x64xf32> to vector<16x64xf32>
    %12 = arith.addf %9, %11 : vector<16x64xf32>
    %c0_8 = arith.constant 0 : index
    %c0_9 = arith.constant 0 : index
    %13 = vector.load %arg5[%c0_8, %c0_9] : memref<16x64xf32, #tpu.memory_space<vmem>>, vector<16x64xf32>
    tpu.vector_store %arg5[%c0_8, %c0_9], %12 {strides = array<i32>} : memref<16x64xf32, #tpu.memory_space<vmem>>, vector<16x64xf32>,
    return
  }
  func.func @transform_0(%arg0: i32) -> (i32, i32) {
    %c0_i32 = arith.constant 0 : i32
    %c0_i32_0 = arith.constant 0 : i32
    return %arg0, %c0_i32 : i32, i32
  }
  func.func @transform_1(%arg0: i32) -> (i32, i32) {
    %c0_i32 = arith.constant 0 : i32
    %c0_i32_0 = arith.constant 0 : i32
    return %arg0, %c0_i32 : i32, i32
  }
  func.func @transform_2(%arg0: i32) -> (i32, i32) {
    %c0_i32 = arith.constant 0 : i32
    %c0_i32_0 = arith.constant 0 : i32
    %c0_i32_1 = arith.constant 0 : i32
    return %c0_i32, %c0_i32_0 : i32, i32
  }
  func.func @transform_3(%arg0: i32) -> (i32, i32) {
    %c0_i32 = arith.constant 0 : i32
    %c0_i32_0 = arith.constant 0 : i32
    %c0_i32_1 = arith.constant 0 : i32
    return %c0_i32, %c0_i32_0 : i32, i32
  }
  func.func @transform_4(%arg0: i32) -> (i32, i32) {
    %c0_i32 = arith.constant 0 : i32
    %c0_i32_0 = arith.constant 0 : i32
    return %arg0, %c0_i32 : i32, i32
  }
}

</mosaic_0001>

<llo_original>
// kernel: tpu_custom_call.1
$region0: #{tpu_custom_call.1}
  #allocation0 [shape = 'u32[]', space=smem, size = 0x4, offset = 0x4, fixed_abs, tag = 'smem constant byte address 0x4 - core index']
  #allocation1 [shape = 'u32[144,128]{1,0:T(1,128)}', space=vmem, size = 0x12000, scoped, tag = 'internal scratch']
  %s0 = inlined_call_operand.hbm [shape: f32[16,32], index: 0, kind: input, shape index: {}]
  %s1 = inlined_call_operand.hbm [shape: f32[16,32], index: 1, kind: input, shape index: {}]
  %s2 = inlined_call_operand.hbm [shape: bf16[32,64], index: 2, kind: input, shape index: {}]
  %s3 = inlined_call_operand.vmem [shape: f32[1,64], index: 3, kind: input, shape index: {}]
  %s4 = inlined_call_operand.hbm [shape: f32[16,64], index: 4, kind: output, shape index: {}]
  %s5 = sld [smem:[#allocation0]]
  $region38: #{tpu_custom_call.1} parent=0
    _
  %s7 = ssub.s32 1, %s5
  %s8 = scalar_select 0, %s7, %s5
  $region1: #{tpu_custom_call.1} parent=0
    #allocation2 [shape = 'u8[8192]{0}', space=vmem, size = 0x2000, scoped, tag = 'input window, operand 0, single buffered']
    #allocation3 [shape = 's32[1]{0}', space=sflag, size = 0x4, scoped, tag = 'scoped memory for tpu_custom_call.1']
    #allocation4 [shape = 's32[1]{0}', space=sflag, size = 0x4, scoped, tag = 'scoped memory for tpu_custom_call.1']
    #allocation5 [shape = 'u8[8192]{0}', space=vmem, size = 0x2000, scoped, tag = 'input window, operand 1, single buffered']
    #allocation6 [shape = 's32[1]{0}', space=sflag, size = 0x4, scoped, tag = 'scoped memory for tpu_custom_call.1']
    #allocation7 [shape = 'u8[8192]{0}', space=vmem, size = 0x2000, scoped, tag = 'input window, operand 2, single buffered']
    #allocation8 [shape = 'u8[8192]{0}', space=vmem, size = 0x2000, scoped, tag = 'output window, operand 0, single buffered']
    %9 = vsyncpa [#allocation3], 0
    %10 = vsyncpa [#allocation6], 0
    %11 = vsyncpa [#allocation4], 0
    // Predicated region
    $region2: #{tpu_custom_call.1} parent=1 // pred_check
      _
    $region3: #{tpu_custom_call.1} parent=1 // pred_check_branch
      %13 = sbr.rel (0) target = $region5
    $region4: #{tpu_custom_call.1} parent=1 // pred_region
      %s15 = ssub.s32 256, 256
      %16 = vsyncadd [#allocation3], %s15
      %s17 = sshll.u32 [#allocation2], 4
      %s18 = int_to_ptr.vmem [resolvable:$true] %s17
      %23 = dma.hbm_to_vmem [thread:$0]  %s0, 256, %s18, [#allocation3], 128, 128, 8
    $region5: #{tpu_custom_call.1} parent=1 // pred_fallthru
      _
    // Predicated region
    $region6: #{tpu_custom_call.1} parent=1 // pred_check
      _
    $region7: #{tpu_custom_call.1} parent=1 // pred_check_branch
      %25 = sbr.rel (0) target = $region9
    $region8: #{tpu_custom_call.1} parent=1 // pred_region
      %s27 = ssub.s32 256, 256
      %28 = vsyncadd [#allocation6], %s27
      %s29 = sshll.u32 [#allocation5], 4
      %s30 = int_to_ptr.vmem [resolvable:$true] %s29
      %35 = dma.hbm_to_vmem [thread:$0]  %s1, 256, %s30, [#allocation6], 128, 128, 8
    $region9: #{tpu_custom_call.1} parent=1 // pred_fallthru
      _
    // Predicated region
    $region10: #{tpu_custom_call.1} parent=1 // pred_check
      _
    $region11: #{tpu_custom_call.1} parent=1 // pred_check_branch
      %37 = sbr.rel (0) target = $region13
    $region12: #{tpu_custom_call.1} parent=1 // pred_region
      %s39 = ssub.s32 256, 256
      %40 = vsyncadd [#allocation6], %s39
      %s41 = sshll.u32 [#allocation7], 4
      %s42 = int_to_ptr.vmem [resolvable:$true] %s41
      %47 = dma.hbm_to_vmem [thread:$0]  %s2, 256, %s42, [#allocation6], 64, 64, 4
    $region13: #{tpu_custom_call.1} parent=1 // pred_fallthru
      _
    // Predicated region
    $region14: #{tpu_custom_call.1} parent=1 // pred_check
      _
    $region15: #{tpu_custom_call.1} parent=1 // pred_check_branch
      %49 = sbr.rel (0) target = $region17
    $region16: #{tpu_custom_call.1} parent=1 // pred_region
      _
    $region17: #{tpu_custom_call.1} parent=1 // pred_fallthru
      _
    // Predicated region
    $region18: #{tpu_custom_call.1} parent=1 // pred_check
      _
    $region19: #{tpu_custom_call.1} parent=1 // pred_check_branch
      %51 = sbr.rel (0) target = $region21
    $region20: #{tpu_custom_call.1} parent=1 // pred_region
      %52 = dma.done [#allocation3], 256
    $region21: #{tpu_custom_call.1} parent=1 // pred_fallthru
      _
    // Predicated region
    $region22: #{tpu_custom_call.1} parent=1 // pred_check
      _
    $region23: #{tpu_custom_call.1} parent=1 // pred_check_branch
      %54 = sbr.rel (0) target = $region25
    $region24: #{tpu_custom_call.1} parent=1 // pred_region
      %55 = dma.done [#allocation6], 256
    $region25: #{tpu_custom_call.1} parent=1 // pred_fallthru
      _
    // Predicated region
    $region26: #{tpu_custom_call.1} parent=1 // pred_check
      _
    $region27: #{tpu_custom_call.1} parent=1 // pred_check_branch
      %57 = sbr.rel (0) target = $region29
    $region28: #{tpu_custom_call.1} parent=1 // pred_region
      %58 = dma.done [#allocation6], 256
    $region29: #{tpu_custom_call.1} parent=1 // pred_fallthru
      _
    %v60 = vld [vmem:[#allocation7] sm:$0xf]
    %v61 = vld [vmem:[#allocation7 + $0x4] sm:$0xf]
    %v62 = vld [vmem:[#allocation7 + $0x8] sm:$0xf]
    %v63 = vld [vmem:[#allocation7 + $0xc] sm:$0xf]
    %v64 = vld [vmem:[#allocation2] sm:$0xff]
    %v65 = vld [vmem:[#allocation2 + $0x8] sm:$0xff]
    %v66 = vpack.c.bf16 %v65, %v64
    %v71 = vunpack.c.l.b16 %v60
    %v72 = vunpack.c.l.b16 %v61
    %v73 = vunpack.c.l.b16 %v62
    %v74 = vunpack.c.l.b16 %v63
    %v75 = vpack.c.b16 %v72, %v71
    %v76 = vpack.c.b16 %v74, %v73
    %vm79 = vcmask 261120
    %v81 = vsel %vm79, %v66, 0
    %83 = vmatprep.subr.bf16.mxu0 0
    %84 = vmatpush1.bf16.msra.mxu0 %v75
    %85 = vmatprep.subr.bf16.mxu0 0
    %86 = vmatpush1.bf16.msra.mxu0 %v76
    %87 = vmatprep.subr.bf16.mxu0 0
    %88 = vmatpush1.bf16.msra.mxu0 0
    %89 = vmatprep.subr.bf16.mxu0 0
    %90 = vmatpush1.bf16.msra.mxu0 0
    %91 = vmatprep.subr.bf16.mxu0 0
    %92 = vmatpush1.bf16.msra.mxu0 0
    %93 = vmatprep.subr.bf16.mxu0 0
    %94 = vmatpush1.bf16.msra.mxu0 0
    %95 = vmatprep.subr.bf16.mxu0 0
    %96 = vmatpush1.bf16.msra.mxu0 0
    %97 = vmatprep.subr.bf16.mxu0 0
    %98 = vmatpush1.bf16.msra.mxu0 0
    %99 = vmatprep.subr.bf16.mxu0 0
    %100 = vmatpush1.bf16.msra.mxu0 0
    %101 = vmatprep.subr.bf16.mxu0 0
    %102 = vmatpush1.bf16.msra.mxu0 0
    %103 = vmatprep.subr.bf16.mxu0 0
    %104 = vmatpush1.bf16.msra.mxu0 0
    %105 = vmatprep.subr.bf16.mxu0 0
    %106 = vmatpush1.bf16.msra.mxu0 0
    %107 = vmatprep.subr.bf16.mxu0 0
    %108 = vmatpush1.bf16.msra.mxu0 0
    %109 = vmatprep.subr.bf16.mxu0 0
    %110 = vmatpush1.bf16.msra.mxu0 0
    %111 = vmatprep.subr.bf16.mxu0 0
    %112 = vmatpush1.bf16.msra.mxu0 0
    %113 = vmatprep.subr.bf16.mxu0 0
    %114 = vmatpush1.bf16.msra.mxu0 0
    %115 = vmatprep.mubr.bf16.mxu0 0
    %116 = vmatmul.mubr.bf16.gmra.mrb[0].mxu0 %v81
    %v117 = vpop.f32.mrb[0].mxu0
    %v118 = vadd.f32 0.0, %v117
    %v119 = vpop.f32.mrb[0].mxu0
    %v120 = vpop.f32.mrb[0].mxu0
    %v121 = vadd.f32 0.0, %v120
    %v122 = vpop.f32.mrb[0].mxu0
    %123 = vdwg.mxu0
    %v124 = vld [vmem:[#allocation5] sm:$0xff]
    %v125 = vld [vmem:[#allocation5 + $0x8] sm:$0xff]
    %v126 = vpack.c.bf16 %v125, %v124
    %127 = vrot.lane.b32.xlu0 %v75, 96
    %v128 = vpop.permute.xlu0 %127
    %129 = vrot.lane.b32.xlu0 %v76, 96
    %v130 = vpop.permute.xlu0 %129
    %v134 = vsel %vm79, %v126, 0
    %136 = vmatprep.subr.bf16.mxu0 0
    %137 = vmatpush1.bf16.msra.mxu0 %v128
    %138 = vmatprep.subr.bf16.mxu0 0
    %139 = vmatpush1.bf16.msra.mxu0 %v130
    %140 = vmatprep.subr.bf16.mxu0 0
    %141 = vmatpush1.bf16.msra.mxu0 0
    %142 = vmatprep.subr.bf16.mxu0 0
    %143 = vmatpush1.bf16.msra.mxu0 0
    %144 = vmatprep.subr.bf16.mxu0 0
    %145 = vmatpush1.bf16.msra.mxu0 0
    %146 = vmatprep.subr.bf16.mxu0 0
    %147 = vmatpush1.bf16.msra.mxu0 0
    %148 = vmatprep.subr.bf16.mxu0 0
    %149 = vmatpush1.bf16.msra.mxu0 0
    %150 = vmatprep.subr.bf16.mxu0 0
    %151 = vmatpush1.bf16.msra.mxu0 0
    %152 = vmatprep.subr.bf16.mxu0 0
    %153 = vmatpush1.bf16.msra.mxu0 0
    %154 = vmatprep.subr.bf16.mxu0 0
    %155 = vmatpush1.bf16.msra.mxu0 0
    %156 = vmatprep.subr.bf16.mxu0 0
    %157 = vmatpush1.bf16.msra.mxu0 0
    %158 = vmatprep.subr.bf16.mxu0 0
    %159 = vmatpush1.bf16.msra.mxu0 0
    %160 = vmatprep.subr.bf16.mxu0 0
    %161 = vmatpush1.bf16.msra.mxu0 0
    %162 = vmatprep.subr.bf16.mxu0 0
    %163 = vmatpush1.bf16.msra.mxu0 0
    %164 = vmatprep.subr.bf16.mxu0 0
    %165 = vmatpush1.bf16.msra.mxu0 0
    %166 = vmatprep.subr.bf16.mxu0 0
    %167 = vmatpush1.bf16.msra.mxu0 0
    %168 = vmatprep.mubr.bf16.mxu0 0
    %169 = vmatmul.mubr.bf16.gmra.mrb[0].mxu0 %v134
    %v170 = vpop.f32.mrb[0].mxu0
    %v171 = vadd.f32 0.0, %v170
    %v172 = vpop.f32.mrb[0].mxu0
    %v173 = vpop.f32.mrb[0].mxu0
    %v174 = vadd.f32 0.0, %v173
    %v175 = vpop.f32.mrb[0].mxu0
    %176 = vdwg.mxu0
    %179 = vrot.lane.b32.xlu0 %v171, 32
    %v180 = vpop.permute.xlu0 %179
    %181 = vrot.lane.b32.xlu0 %v174, 32
    %v182 = vpop.permute.xlu0 %181
    %v185 = vsel %vm79, %v118, %v180
    %v186 = vsel %vm79, %v121, %v182
    %v187 = vld [vmem:[%s3] sm:$0x1]
    %v189 = vlaneseq
    %v190 = vshrl.u32 %v189, 7
    %v191 = vsub.s32 0, %v190
    %v192 = vrot.slane %v187, %v191
    %v194 = vadd.f32 %v185, %v192
    %v195 = vadd.f32 %v186, %v192
    %vm196 = vcmask 523264
    %197 = vst.msk [vmem:[#allocation8] sm:$0xff] %vm196, %v194
    %198 = vst.msk [vmem:[#allocation8 + $0x8] sm:$0xff] %vm196, %v195
    // Predicated region
    $region30: #{tpu_custom_call.1} parent=1 // pred_check
      _
    $region31: #{tpu_custom_call.1} parent=1 // pred_check_branch
      %200 = sbr.rel (0) target = $region33
    $region32: #{tpu_custom_call.1} parent=1 // pred_region
      %s202 = ssub.s32 256, 256
      %203 = vsyncadd [#allocation4], %s202
      %s204 = sshll.u32 [#allocation8], 4
      %s205 = int_to_ptr.vmem [resolvable:$true] %s204
      %210 = dma.vmem_to_hbm [thread:$0]  %s205, 256, %s4, [#allocation4], 128, 128, 8
    $region33: #{tpu_custom_call.1} parent=1 // pred_fallthru
      _
    // Predicated region
    $region34: #{tpu_custom_call.1} parent=1 // pred_check
      _
    $region35: #{tpu_custom_call.1} parent=1 // pred_check_branch
      %212 = sbr.rel (0) target = $region37
    $region36: #{tpu_custom_call.1} parent=1 // pred_region
      %213 = dma.done [#allocation4], 256
    $region37: #{tpu_custom_call.1} parent=1 // pred_fallthru
      _
    %214 = vsyncpa [#allocation3], 1
    %215 = vsyncpa [#allocation6], 1
    %216 = vsyncpa [#allocation4], 1

</llo_original>
